<compile_context>
chip_gen: v6e
topology: v6e:2x2x1
jax: 0.10.0
libtpu: 0.0.40
codegen_flags: <defaults>
</compile_context>

<pallas_src>
import functools

import jax
import jax.numpy as jnp
from jax import lax
from jax.experimental import pallas as pl
from jax.experimental.pallas import tpu as pltpu


_LANE = 128
_TK_CAP = 2048                        # max contraction tile (multiple of 128)
_F_BUDGET_BYTES = 24 * 1024 * 1024    # VMEM budget for streamed F buffers
_VMEM_LIMIT_BYTES = 48 * 1024 * 1024  # > 16/32 MiB defaults, < v7x 64 MiB phys


# --------------------------------------------------------------------------
# Kernels
# --------------------------------------------------------------------------
def _gram_kernel(f_ref, g_ref, *, inv_norm):
    """Accumulate F_k @ F_k.T over the tiled contraction axis; scale at end."""
    k = pl.program_id(0)

    @pl.when(k == 0)
    def _():
        g_ref[...] = jnp.zeros_like(g_ref)

    f = f_ref[...]                                 # native dtype -> MXU
    g_ref[...] += lax.dot_general(
        f, f,
        dimension_numbers=(((1,), (1,)), ((), ())),   # contract lanes: F @ F.T
        preferred_element_type=jnp.float32,
    )

    @pl.when(k == pl.num_programs(0) - 1)
    def _():
        g_ref[...] = g_ref[...] * inv_norm


def _style_loss_kernel(f_ref, t_ref, loss_ref, acc_ref, *, inv_norm, inv_nelem):
    """Tiled gram accumulation; MSE against target only in the finalize step."""
    k = pl.program_id(0)

    @pl.when(k == 0)
    def _():
        acc_ref[...] = jnp.zeros_like(acc_ref)

    f = f_ref[...]
    acc_ref[...] += lax.dot_general(
        f, f,
        dimension_numbers=(((1,), (1,)), ((), ())),
        preferred_element_type=jnp.float32,
    )

    @pl.when(k == pl.num_programs(0) - 1)
    def _():
        g = acc_ref[...] * inv_norm
        diff = g - t_ref[...]
        loss_ref[0, 0] = jnp.sum(diff * diff) * inv_nelem


# --------------------------------------------------------------------------
# Host-side glue: padding / tiling decisions
# --------------------------------------------------------------------------
def _round_up(v, m):
    return (v + m - 1) // m * m


def _sublane_multiple(dtype):
    # 8 sublanes of 32-bit words per vreg; sub-32-bit dtypes pack along sublanes.
    return max(8, 32 // jnp.dtype(dtype).itemsize)


def _prep_features(x):
    """NCHW -> zero-padded (n_pad, m_pad) feature matrix + tiling params."""
    a, b, c, d = x.shape
    n, m = a * b, c * d
    f = x.reshape(n, m)
    itemsize = jnp.dtype(x.dtype).itemsize

    n_pad = _round_up(n, _sublane_multiple(x.dtype))
    m_128 = _round_up(m, _LANE)

    # Largest TK (multiple of 128) so ~3 pipeline buffers of (n_pad, TK) fit
    # the streamed-input budget; capped and never larger than lane-padded m.
    tk = (_F_BUDGET_BYTES // (3 * n_pad * itemsize)) // _LANE * _LANE
    tk = max(_LANE, min(tk, _TK_CAP, m_128))
    m_pad = _round_up(m, tk)

    if (n_pad, m_pad) != (n, m):
        # Zero rows/columns leave F @ F.T unchanged on the original block.
        f = jnp.pad(f, ((0, n_pad - n), (0, m_pad - m)))
    return f, n, m, n_pad, m_pad, tk


def _f_block_spec(n_pad, tk, grid_k):
    """Streamed F tile spec; triple-buffer when the pipeline is deep enough."""
    idx = lambda k: (0, k)
    if grid_k > 2:
        try:
            return pl.BlockSpec((n_pad, tk), idx, pipeline_mode=pl.Buffered(3))
        except Exception:
            pass  # older jax without pipeline_mode/Buffered: default 2 buffers
    return pl.BlockSpec((n_pad, tk), idx)


def _compiler_params():
    return pltpu.CompilerParams(
        dimension_semantics=("arbitrary",),      # contraction axis
        vmem_limit_bytes=_VMEM_LIMIT_BYTES,
    )


# --------------------------------------------------------------------------
# Wrappers
# --------------------------------------------------------------------------
def _gram_padded(x):
    """Padded gram matrix (n_pad, n_pad) f32; also returns (n, n_pad)."""
    f, n, m, n_pad, m_pad, tk = _prep_features(x)
    a, b, c, d = x.shape
    inv_norm = 1.0 / float(a * b * c * d)
    grid_k = m_pad // tk
    itemsize = jnp.dtype(x.dtype).itemsize

    g = pl.pallas_call(
        functools.partial(_gram_kernel, inv_norm=inv_norm),
        out_shape=jax.ShapeDtypeStruct((n_pad, n_pad), jnp.float32),
        grid_spec=pltpu.PrefetchScalarGridSpec(
            num_scalar_prefetch=0,
            grid=(grid_k,),
            in_specs=[_f_block_spec(n_pad, tk, grid_k)],
            out_specs=pl.BlockSpec((n_pad, n_pad), lambda k: (0, 0)),
        ),
        compiler_params=_compiler_params(),
        cost_estimate=pl.CostEstimate(
            flops=2 * n_pad * n_pad * m_pad,
            transcendentals=0,
            bytes_accessed=n_pad * m_pad * itemsize + n_pad * n_pad * 4,
        ),
    )(f)
    return g, n, n_pad


def gram_matrix_pallas(x):
    """Pallas equivalent of gram_matrix(input) for NCHW input x."""
    g, n, _ = _gram_padded(x)
    return g[:n, :n]


def style_loss_pallas(x, target_gram):
    """Scalar loss = mse(gram_matrix(x), target); no gram writeback to HBM."""
    f, n, m, n_pad, m_pad, tk = _prep_features(x)
    a, b, c, d = x.shape
    assert target_gram.shape == (n, n), "style target must match a*b channels"

    t = target_gram.astype(jnp.float32)
    if n_pad != n:
        # Zero padding: padded rows/cols of both G and target are zero -> no
        # contribution to the squared-difference sum.
        t = jnp.pad(t, ((0, n_pad - n), (0, n_pad - n)))

    inv_norm = 1.0 / float(a * b * c * d)
    inv_nelem = 1.0 / float(n * n)          # mean over the ORIGINAL n*n entries
    grid_k = m_pad // tk
    itemsize = jnp.dtype(x.dtype).itemsize

    loss = pl.pallas_call(
        functools.partial(
            _style_loss_kernel, inv_norm=inv_norm, inv_nelem=inv_nelem),
        out_shape=jax.ShapeDtypeStruct((1, 1), jnp.float32),
        grid_spec=pltpu.PrefetchScalarGridSpec(
            num_scalar_prefetch=0,
            grid=(grid_k,),
            in_specs=[
                _f_block_spec(n_pad, tk, grid_k),
                pl.BlockSpec((n_pad, n_pad), lambda k: (0, 0)),   # resident target
            ],
            out_specs=pl.BlockSpec(memory_space=pltpu.MemorySpace.SMEM),
            scratch_shapes=[pltpu.VMEM((n_pad, n_pad), jnp.float32)],
        ),
        compiler_params=_compiler_params(),
        cost_estimate=pl.CostEstimate(
            flops=2 * n_pad * n_pad * m_pad,
            transcendentals=0,
            bytes_accessed=n_pad * m_pad * itemsize + n_pad * n_pad * 4 + 4,
        ),
    )(f, t)
    return loss[0, 0]


class StyleLoss:
    """Functional analogue of the PyTorch StyleLoss module."""

    def __init__(self, target_feature):
        # .detach(): no autograd tape here, target is just a constant array.
        self._shape = target_feature.shape
        g_pad, n, _ = _gram_padded(target_feature)
        self.target = g_pad[:n, :n]          # exposed like the PyTorch module
        self.loss = None

    def __call__(self, x):
        assert x.shape == self._shape, "feature map must match the style target"
        self.loss = style_loss_pallas(x, self.target)
        return x                             # forward returns the input unchanged


# --------------------------------------------------------------------------
# Reference (plain JAX) for verification
# --------------------------------------------------------------------------
def _gram_ref(x):
    a, b, c, d = x.shape
    f = x.reshape(a * b, c * d).astype(jnp.float32)
    g = jnp.dot(f, f.T, precision=lax.Precision.HIGHEST)
    return g / float(a * b * c * d)


def _loss_ref(x, target):
    g = _gram_ref(x)
    return jnp.mean((g - target) ** 2)


# --------------------------------------------------------------------------
if __name__ == "__main__":
    key = jax.random.PRNGKey(0)
    k_t1, k_x1, k_t2, k_x2 = jax.random.split(key, 4)

    # Case 1: small shape, single contraction tile (grid_k == 1).
    shape1 = (2, 4, 16, 16)
    target1 = 2.0 * jax.random.normal(k_t1, shape1, dtype=jnp.float32)
    x1 = jax.random.normal(k_x1, shape1, dtype=jnp.float32)

    # Case 2: larger spatial extent -> tiled contraction (grid_k == 3),
    # exercising the accumulator init/finalize path and triple buffering.
    shape2 = (2, 8, 96, 64)
    target2 = 2.0 * jax.random.normal(k_t2, shape2, dtype=jnp.float32)
    x2 = jax.random.normal(k_x2, shape2, dtype=jnp.float32)

    for target_feature, x in ((target1, x1), (target2, x2)):
        module = StyleLoss(target_feature)
        out = module(x)
        jax.block_until_ready(out)
        jax.block_until_ready(module.loss)

        # Pass-through semantics.
        assert out.shape == x.shape and jnp.allclose(out, x)

        # Gram matrices vs plain-JAX reference.
        ref_target = _gram_ref(target_feature)
        assert jnp.allclose(module.target, ref_target, rtol=2e-2, atol=1e-6)
        g_x = gram_matrix_pallas(x)
        assert jnp.allclose(g_x, _gram_ref(x), rtol=2e-2, atol=1e-6)

        # Fused loss kernel vs MSE built from the (identical-matmul) gram
        # kernel outputs: validates the reduction path independent of MXU
        # precision mode.
        loss_consistent = jnp.mean((g_x - module.target) ** 2)
        assert jnp.allclose(module.loss, loss_consistent, rtol=1e-3, atol=1e-9)

        # Fused loss kernel vs pure-JAX reference (sanity).
        ref_loss = _loss_ref(x, ref_target)
        assert jnp.allclose(module.loss, ref_loss, rtol=5e-2, atol=1e-7)

    print("KERNEL_OK")
</pallas_src>

<mosaic_0001>
module attributes {stable_mosaic.version = 11 : i64} {
  func.func @_gram_kernel(%arg0: i32, %arg1: memref<8x256xf32, #tpu.memory_space<vmem>>, %arg2: memref<8x8xf32, #tpu.memory_space<vmem>>) attributes {dimension_semantics = [#tpu.dimension_semantics<arbitrary>], iteration_bounds = array<i64: 1>, scalar_prefetch = 0 : i64, scratch_operands = 0 : i64, tpu.core_type = #tpu.core_type<tc>, window_params = [{transform_indices = @transform_0, window_bounds = array<i64: 8, 256>}, {pipeline_mode = #tpu.pipeline_mode<synchronous>, transform_indices = @transform_1, window_bounds = array<i64: 8, 8>}]} {
    %c0_i32 = arith.constant 0 : i32
    %0 = arith.cmpi eq, %arg0, %c0_i32 : i32
    %1 = arith.extui %0 : i1 to i32
    %c0_i32_0 = arith.constant 0 : i32
    %2 = arith.cmpi ne, %1, %c0_i32_0 : i32
    scf.if %2 {
      %cst_8 = arith.constant 0.000000e+00 : f32
      %11 = vector.broadcast %cst_8 : f32 to vector<8x8xf32>
      %c0_9 = arith.constant 0 : index
      %c0_10 = arith.constant 0 : index
      %12 = vector.load %arg2[%c0_9, %c0_10] : memref<8x8xf32, #tpu.memory_space<vmem>>, vector<8x8xf32>
      tpu.vector_store %arg2[%c0_9, %c0_10], %11 {strides = array<i32>} : memref<8x8xf32, #tpu.memory_space<vmem>>, vector<8x8xf32>,
    } else {
    }
    %c0 = arith.constant 0 : index
    %c0_1 = arith.constant 0 : index
    %3 = vector.load %arg1[%c0, %c0_1] : memref<8x256xf32, #tpu.memory_space<vmem>>, vector<8x256xf32>
    %c0_2 = arith.constant 0 : index
    %c0_3 = arith.constant 0 : index
    %4 = vector.load %arg2[%c0_2, %c0_3] : memref<8x8xf32, #tpu.memory_space<vmem>>, vector<8x8xf32>
    %cst = arith.constant dense<0.000000e+00> : vector<8x8xf32>
    %5 = tpu.matmul %3, %3, %cst {dimension_numbers = #tpu.dot_dimension_numbers<[1], [1], [0], [0], [0, 0, 1, 0], [], []>} : vector<8x256xf32>, vector<8x256xf32>, vector<8x8xf32> -> vector<8x8xf32>
    %6 = arith.addf %4, %5 : vector<8x8xf32>
    %c0_4 = arith.constant 0 : index
    %c0_5 = arith.constant 0 : index
    %7 = vector.load %arg2[%c0_4, %c0_5] : memref<8x8xf32, #tpu.memory_space<vmem>>, vector<8x8xf32>
    tpu.vector_store %arg2[%c0_4, %c0_5], %6 {strides = array<i32>} : memref<8x8xf32, #tpu.memory_space<vmem>>, vector<8x8xf32>,
    %c0_i32_6 = arith.constant 0 : i32
    %8 = arith.cmpi eq, %arg0, %c0_i32_6 : i32
    %9 = arith.extui %8 : i1 to i32
    %c0_i32_7 = arith.constant 0 : i32
    %10 = arith.cmpi ne, %9, %c0_i32_7 : i32
    scf.if %10 {
      %c0_8 = arith.constant 0 : index
      %c0_9 = arith.constant 0 : index
      %11 = vector.load %arg2[%c0_8, %c0_9] : memref<8x8xf32, #tpu.memory_space<vmem>>, vector<8x8xf32>
      %cst_10 = arith.constant 4.8828125E-4 : f32
      %12 = vector.broadcast %cst_10 : f32 to vector<8x8xf32>
      %13 = arith.mulf %11, %12 : vector<8x8xf32>
      %c0_11 = arith.constant 0 : index
      %c0_12 = arith.constant 0 : index
      %14 = vector.load %arg2[%c0_11, %c0_12] : memref<8x8xf32, #tpu.memory_space<vmem>>, vector<8x8xf32>
      tpu.vector_store %arg2[%c0_11, %c0_12], %13 {strides = array<i32>} : memref<8x8xf32, #tpu.memory_space<vmem>>, vector<8x8xf32>,
    } else {
    }
    return
  }
  func.func @transform_0(%arg0: i32) -> (i32, i32) {
    %c0_i32 = arith.constant 0 : i32
    %c0_i32_0 = arith.constant 0 : i32
    return %c0_i32, %arg0 : i32, i32
  }
  func.func @transform_1(%arg0: i32) -> (i32, i32) {
    %c0_i32 = arith.constant 0 : i32
    %c0_i32_0 = arith.constant 0 : i32
    %c0_i32_1 = arith.constant 0 : i32
    return %c0_i32, %c0_i32_0 : i32, i32
  }
}

</mosaic_0001>

<llo_original>
// kernel: tpu_custom_call.1
$region0: #{tpu_custom_call.1}
  #allocation0 [shape = 'u32[]', space=smem, size = 0x4, offset = 0x4, fixed_abs, tag = 'smem constant byte address 0x4 - core index']
  #allocation1 [shape = 'u32[144,128]{1,0:T(1,128)}', space=vmem, size = 0x12000, scoped, tag = 'internal scratch']
  %s0 = inlined_call_operand.hbm [shape: f32[8,256], index: 0, kind: input, shape index: {}]
  %s1 = inlined_call_operand.hbm [shape: f32[8,8], index: 1, kind: output, shape index: {}]
  %s2 = sld [smem:[#allocation0]]
  $region26: #{tpu_custom_call.1} parent=0
    _
  %s4 = ssub.s32 1, %s2
  %s5 = scalar_select 0, %s4, %s2
  $region1: #{tpu_custom_call.1} parent=0
    #allocation2 [shape = 'u8[8192]{0}', space=vmem, size = 0x2000, scoped, tag = 'input window, operand 0, single buffered']
    #allocation3 [shape = 's32[1]{0}', space=sflag, size = 0x4, scoped, tag = 'scoped memory for tpu_custom_call.1']
    #allocation4 [shape = 's32[1]{0}', space=sflag, size = 0x4, scoped, tag = 'scoped memory for tpu_custom_call.1']
    #allocation5 [shape = 'u8[4096]{0}', space=vmem, size = 0x1000, scoped, tag = 'output window, operand 0, single buffered']
    %6 = vsyncpa [#allocation3], 0
    %7 = vsyncpa [#allocation4], 0
    // Predicated region
    $region2: #{tpu_custom_call.1} parent=1 // pred_check
      _
    $region3: #{tpu_custom_call.1} parent=1 // pred_check_branch
      %9 = sbr.rel (0) target = $region5
    $region4: #{tpu_custom_call.1} parent=1 // pred_region
      %s11 = ssub.s32 256, 256
      %12 = vsyncadd [#allocation3], %s11
      %s14 = sshll.u32 [#allocation2], 4
      %s15 = int_to_ptr.vmem [resolvable:$true] %s14
      %17 = dma.hbm_to_vmem [thread:$0]  %s0, 256, %s15, [#allocation3]
    $region5: #{tpu_custom_call.1} parent=1 // pred_fallthru
      _
    // Predicated region
    $region6: #{tpu_custom_call.1} parent=1 // pred_check
      _
    $region7: #{tpu_custom_call.1} parent=1 // pred_check_branch
      %19 = sbr.rel (0) target = $region9
    $region8: #{tpu_custom_call.1} parent=1 // pred_region
      %20 = dma.done [#allocation3], 256
    $region9: #{tpu_custom_call.1} parent=1 // pred_fallthru
      _
    %p21 = scmp.eq.s32.totalorder 0, 0
    // Predicated region
    $region10: #{tpu_custom_call.1} parent=1 // pred_check
      %p22 = pneg %p21
    $region11: #{tpu_custom_call.1} parent=1 // pred_check_branch
      %24 = sbr.rel (%p22) target = $region13
    $region12: #{tpu_custom_call.1} parent=1 // pred_region
      %vm25 = vcmask 64512
      %26 = vst.msk [vmem:[#allocation5] sm:$0xff] %vm25, 0.0
    $region13: #{tpu_custom_call.1} parent=1 // pred_fallthru
      _
    %v27 = vld [vmem:[#allocation2] sm:$0xff]
    %v28 = vld [vmem:[#allocation2 + $0x8] sm:$0xff]
    %v29 = vld [vmem:[#allocation5] sm:$0xff]
    %30 = vmatprep.subr.mxu0 0.0
    %31 = vmatpush1.xpose.msra.mxu0 0.0
    %32 = vmatprep.subr.mxu0 0.0
    %33 = vmatpush1.xpose.msra.mxu0 0.0
    %34 = vmatprep.subr.mxu0 0.0
    %35 = vmatpush1.xpose.msra.mxu0 0.0
    %36 = vmatprep.subr.mxu0 0.0
    %37 = vmatpush1.xpose.msra.mxu0 0.0
    %38 = vmatprep.subr.mxu0 0.0
    %39 = vmatpush1.xpose.msra.mxu0 0.0
    %40 = vmatprep.subr.mxu0 0.0
    %41 = vmatpush1.xpose.msra.mxu0 0.0
    %42 = vmatprep.subr.mxu0 0.0
    %43 = vmatpush1.xpose.msra.mxu0 0.0
    %44 = vmatprep.subr.mxu0 0.0
    %45 = vmatpush1.xpose.msra.mxu0 0.0
    %46 = vmatprep.subr.mxu0 0.0
    %47 = vmatpush1.xpose.msra.mxu0 0.0
    %48 = vmatprep.subr.mxu0 0.0
    %49 = vmatpush1.xpose.msra.mxu0 0.0
    %50 = vmatprep.subr.mxu0 0.0
    %51 = vmatpush1.xpose.msra.mxu0 0.0
    %52 = vmatprep.subr.mxu0 0.0
    %53 = vmatpush1.xpose.msra.mxu0 0.0
    %54 = vmatprep.subr.mxu0 0.0
    %55 = vmatpush1.xpose.msra.mxu0 0.0
    %56 = vmatprep.subr.mxu0 0.0
    %57 = vmatpush1.xpose.msra.mxu0 0.0
    %58 = vmatprep.subr.mxu0 0.0
    %59 = vmatpush1.xpose.msra.mxu0 0.0
    %60 = vmatprep.subr.mxu0 %v28
    %61 = vmatpush1.xpose.msra.mxu0 %v27
    %62 = vmatprep.subr.mxu0 0.0
    %63 = vmatpush2.xpose.msra.mxu0 0.0
    %64 = vmatprep.subr.mxu0 0.0
    %65 = vmatpush2.xpose.msra.mxu0 0.0
    %66 = vmatprep.subr.mxu0 0.0
    %67 = vmatpush2.xpose.msra.mxu0 0.0
    %68 = vmatprep.subr.mxu0 0.0
    %69 = vmatpush2.xpose.msra.mxu0 0.0
    %70 = vmatprep.subr.mxu0 0.0
    %71 = vmatpush2.xpose.msra.mxu0 0.0
    %72 = vmatprep.subr.mxu0 0.0
    %73 = vmatpush2.xpose.msra.mxu0 0.0
    %74 = vmatprep.subr.mxu0 0.0
    %75 = vmatpush2.xpose.msra.mxu0 0.0
    %76 = vmatprep.subr.mxu0 0.0
    %77 = vmatpush2.xpose.msra.mxu0 0.0
    %78 = vmatprep.subr.mxu0 0.0
    %79 = vmatpush2.xpose.msra.mxu0 0.0
    %80 = vmatprep.subr.mxu0 0.0
    %81 = vmatpush2.xpose.msra.mxu0 0.0
    %82 = vmatprep.subr.mxu0 0.0
    %83 = vmatpush2.xpose.msra.mxu0 0.0
    %84 = vmatprep.subr.mxu0 0.0
    %85 = vmatpush2.xpose.msra.mxu0 0.0
    %86 = vmatprep.subr.mxu0 0.0
    %87 = vmatpush2.xpose.msra.mxu0 0.0
    %88 = vmatprep.subr.mxu0 0.0
    %89 = vmatpush2.xpose.msra.mxu0 0.0
    %90 = vmatprep.subr.mxu0 0.0
    %91 = vmatpush2.xpose.msra.mxu0 0.0
    %92 = vmatprep.subr.mxu0 0.0
    %93 = vmatpush2.xpose.msra.mxu0 0.0
    %94 = vmatprep.mubr.f32.mxu0 %v28
    %95 = vmatmul.mubr.f32.gmra.mxu0 %v27
    %v96 = vpop.f32.mrf.mxu0
    %v97 = vadd.f32 0.0, %v96
    %v98 = vpop.f32.mrf.mxu0
    %99 = vdwg.mxu0
    %v100 = vadd.f32 %v29, %v97
    %vm101 = vcmask 64512
    %102 = vst.msk [vmem:[#allocation5] sm:$0xff] %vm101, %v100
    // Predicated region
    $region14: #{tpu_custom_call.1} parent=1 // pred_check
      %p103 = pneg %p21
    $region15: #{tpu_custom_call.1} parent=1 // pred_check_branch
      %105 = sbr.rel (%p103) target = $region17
    $region16: #{tpu_custom_call.1} parent=1 // pred_region
      %v106 = vld [vmem:[#allocation5] sm:$0xff]
      %v107 = vmul.f32 %v106, 0.00048828125
      %108 = vst.msk [vmem:[#allocation5] sm:$0xff] %vm101, %v107
    $region17: #{tpu_custom_call.1} parent=1 // pred_fallthru
      _
    // Predicated region
    $region18: #{tpu_custom_call.1} parent=1 // pred_check
      _
    $region19: #{tpu_custom_call.1} parent=1 // pred_check_branch
      %110 = sbr.rel (0) target = $region21
    $region20: #{tpu_custom_call.1} parent=1 // pred_region
      %s112 = ssub.s32 128, 128
      %113 = vsyncadd [#allocation4], %s112
      %s115 = sshll.u32 [#allocation5], 4
      %s116 = int_to_ptr.vmem [resolvable:$true] %s115
      %118 = dma.vmem_to_hbm [thread:$0]  %s116, 128, %s1, [#allocation4]
    $region21: #{tpu_custom_call.1} parent=1 // pred_fallthru
      _
    // Predicated region
    $region22: #{tpu_custom_call.1} parent=1 // pred_check
      _
    $region23: #{tpu_custom_call.1} parent=1 // pred_check_branch
      %120 = sbr.rel (0) target = $region25
    $region24: #{tpu_custom_call.1} parent=1 // pred_region
      %121 = dma.done [#allocation4], 128
    $region25: #{tpu_custom_call.1} parent=1 // pred_fallthru
      _
    %122 = vsyncpa [#allocation3], 1
    %123 = vsyncpa [#allocation4], 1

</llo_original>
